<compile_context>
chip_gen: v6e
topology: v6e:2x2x1
jax: 0.10.0
libtpu: 0.0.40
codegen_flags: <defaults>
</compile_context>

<pallas_src>
import math

import jax
import jax.numpy as jnp
from jax.experimental import pallas as pl
from jax.experimental.pallas import tpu as pltpu

LEAKY_SLOPE = 0.01  # torch.nn.LeakyReLU default negative_slope

IN_DIM = 4
HIDDEN = 32
OUT_DIM = 2
PAD_OUT = 8  # layer-3 output rows are zero-padded 2 -> 8 for dense, sublane-aligned stores

# Row layout of the packed parameter slab, shape (PACK_ROWS, HIDDEN) f32 (~13 KiB):
#   rows  0:32   -> W2  (32, 32)   (out, in) — left operand for layer 2
#   rows 32:40   -> W3  ( 8, 32)   rows 0:2 real, rows 2:8 zero
#   rows 40:72   -> W1  (32, 32)   cols 0:4 real (32, 4), rest zero
#   rows 72:104  -> bias columns: col 0 = b1 (32,), col 1 = b2 (32,), col 2 rows 0:2 = b3
PACK_ROWS = 104


def _round_up(n, m):
    return ((n + m - 1) // m) * m


def _leaky_relu(z):
    # Identical to where(z > 0, z, slope*z) for finite inputs; single vmax on the VPU.
    return jnp.maximum(z, LEAKY_SLOPE * z)


def mlp_kernel(x_ref, p_ref, o_ref):
    x = x_ref[...]                       # (IN_DIM, tile_b) — batch on lanes
    p = p_ref[...]                       # (104, 32) packed parameter slab, VMEM resident

    # Static slices of the already-loaded slab (trace-time, tiny one-off relayouts).
    w2 = p[0:32, :]                      # (32, 32)
    w3 = p[32:40, :]                     # ( 8, 32)  rows 2:8 zero
    w1 = p[40:72, 0:IN_DIM]              # (32, 4)
    b1 = p[72:104, 0:1]                  # (32, 1)   broadcast over lanes (batch)
    b2 = p[72:104, 1:2]                  # (32, 1)
    b3 = p[72:80, 2:3]                   # ( 8, 1)   rows 2:8 zero

    h = _leaky_relu(jnp.dot(w1, x, preferred_element_type=jnp.float32) + b1)   # (32, tile_b)
    h = _leaky_relu(jnp.dot(w2, h, preferred_element_type=jnp.float32) + b2)   # (32, tile_b)
    out = jnp.dot(w3, h, preferred_element_type=jnp.float32) + b3              # ( 8, tile_b)
    o_ref[...] = out.astype(o_ref.dtype)


def pack_params(w1, b1, w2, b2, w3, b3):
    """Pack all layer weights/biases into one (104, 32) feature-major slab.
    Weights are given as (in_features, out_features); biases as (out_features,).
    Call ONCE at init; the packed slab is what you hand to network_forward every step."""
    p = jnp.zeros((PACK_ROWS, HIDDEN), jnp.float32)
    p = p.at[0:32, :].set(w2.T)                      # (32, 32) (out, in)
    p = p.at[32:32 + OUT_DIM, :].set(w3.T)           # ( 2, 32) into padded (8, 32)
    p = p.at[40:72, 0:IN_DIM].set(w1.T)              # (32, 4)
    p = p.at[72:104, 0].set(jnp.reshape(b1, (-1,)))
    p = p.at[72:104, 1].set(jnp.reshape(b2, (-1,)))
    p = p.at[72:72 + OUT_DIM, 2].set(jnp.reshape(b3, (-1,)))
    return p


def network_forward(x, packed_params, *, num_cores=1, max_block_b=32768):
    """x: (B, 4) float32 (batch-major).  packed_params: (104, 32) slab from pack_params.
    Returns (B, 2) float32.

    num_cores: set to 2 on v7x (2 TensorCores/chip) so large batches split into exactly
    two balanced blocks; leave at 1 on single-TC v5e/v6e where one big block is fastest.
    """
    B = x.shape[0]
    x_fm = x.T                                       # (4, B) — batch lane-dense

    want_blocks = 1
    if B > max_block_b:
        want_blocks = pl.cdiv(B, max_block_b)
    if num_cores > 1 and B >= 2 * 128:
        want_blocks = max(want_blocks, num_cores)

    if want_blocks == 1:
        # Single block: whole problem VMEM resident, no grid / index-map machinery.
        out_fm = pl.pallas_call(
            mlp_kernel,
            out_shape=jax.ShapeDtypeStruct((PAD_OUT, B), jnp.float32),
        )(x_fm, packed_params)
    else:
        # Balanced, 128-aligned blocks along the (lane) batch axis; "parallel" so the
        # two TensorCores on v7x each take their share.  Ragged tails are masked.
        tile_b = _round_up(pl.cdiv(B, want_blocks), 128)
        num_blocks = pl.cdiv(B, tile_b)
        out_fm = pl.pallas_call(
            mlp_kernel,
            out_shape=jax.ShapeDtypeStruct((PAD_OUT, B), jnp.float32),
            grid=(num_blocks,),
            in_specs=[
                pl.BlockSpec((IN_DIM, tile_b), lambda i: (0, i)),
                # Same block every iteration -> the ~13 KiB slab stays VMEM resident.
                pl.BlockSpec((PACK_ROWS, HIDDEN), lambda i: (0, 0)),
            ],
            out_specs=pl.BlockSpec((PAD_OUT, tile_b), lambda i: (0, i)),
            compiler_params=pltpu.CompilerParams(dimension_semantics=("parallel",)),
        )(x_fm, packed_params)

    return out_fm[:OUT_DIM, :].T                     # (B, 2)


def init_params(key):
    """Deterministic init mirroring torch.nn.Linear's U(-1/sqrt(fan_in), +1/sqrt(fan_in)).
    Weights stored as (in_features, out_features); biases as (out_features,)."""
    dims = [(IN_DIM, HIDDEN), (HIDDEN, HIDDEN), (HIDDEN, OUT_DIM)]
    params = {}
    for i, (fan_in, fan_out) in enumerate(dims, start=1):
        key, kw, kb = jax.random.split(key, 3)
        bound = 1.0 / math.sqrt(fan_in)
        params[f"w{i}"] = jax.random.uniform(
            kw, (fan_in, fan_out), jnp.float32, -bound, bound
        )
        params[f"b{i}"] = jax.random.uniform(
            kb, (fan_out,), jnp.float32, -bound, bound
        )
    return params


def reference_forward(x, params):
    h = _leaky_relu(x @ params["w1"] + params["b1"])
    h = _leaky_relu(h @ params["w2"] + params["b2"])
    return h @ params["w3"] + params["b3"]


# TODO(synk): MSELoss / Adam optimizer state from the PyTorch module are training-side
# machinery, not part of forward(); they are intentionally not implemented here.

if __name__ == "__main__":
    key = jax.random.PRNGKey(0)
    params = init_params(key)
    packed = pack_params(
        params["w1"], params["b1"],
        params["w2"], params["b2"],
        params["w3"], params["b3"],
    )
    packed = jax.block_until_ready(packed)  # packed once; reused every forward call

    # 1) Real cartpole case: small batch -> single-block, no-grid path.
    key, kx = jax.random.split(key)
    B = 8
    x = jax.random.normal(kx, (B, IN_DIM), dtype=jnp.float32)
    out = jax.block_until_ready(network_forward(x, packed))
    ref = reference_forward(x, params)
    assert out.shape == (B, OUT_DIM), out.shape
    assert jnp.allclose(out, ref, atol=1e-5, rtol=1e-5), "small-batch mismatch vs reference"

    # 2) Larger batch with a 2-way balanced split (v7x-style) + ragged tail block.
    key, kx2 = jax.random.split(key)
    B2 = 384
    x2 = jax.random.normal(kx2, (B2, IN_DIM), dtype=jnp.float32)
    out2 = jax.block_until_ready(network_forward(x2, packed, num_cores=2))
    ref2 = reference_forward(x2, params)
    assert out2.shape == (B2, OUT_DIM), out2.shape
    assert jnp.allclose(out2, ref2, atol=1e-5, rtol=1e-5), "tiled-batch mismatch vs reference"

    print("KERNEL_OK")
</pallas_src>

<mosaic_0001>
module attributes {stable_mosaic.version = 11 : i64} {
  func.func @mlp_kernel(%arg0: memref<4x8xf32, #tpu.memory_space<vmem>>, %arg1: memref<104x32xf32, #tpu.memory_space<vmem>>, %arg2: memref<8x8xf32, #tpu.memory_space<vmem>>) attributes {dimension_semantics = [], scalar_prefetch = 0 : i64, scratch_operands = 0 : i64, tpu.core_type = #tpu.core_type<tc>} {
    %c0 = arith.constant 0 : index
    %c0_0 = arith.constant 0 : index
    %0 = vector.load %arg0[%c0, %c0_0] : memref<4x8xf32, #tpu.memory_space<vmem>>, vector<4x8xf32>
    %c0_1 = arith.constant 0 : index
    %c0_2 = arith.constant 0 : index
    %1 = vector.load %arg1[%c0_1, %c0_2] : memref<104x32xf32, #tpu.memory_space<vmem>>, vector<104x32xf32>
    %2 = vector.extract_strided_slice %1 {offsets = [0, 0], sizes = [32, 32], strides = [1, 1]} : vector<104x32xf32> to vector<32x32xf32>
    %3 = vector.extract_strided_slice %1 {offsets = [32, 0], sizes = [8, 32], strides = [1, 1]} : vector<104x32xf32> to vector<8x32xf32>
    %4 = vector.extract_strided_slice %1 {offsets = [40, 0], sizes = [32, 4], strides = [1, 1]} : vector<104x32xf32> to vector<32x4xf32>
    %5 = vector.extract_strided_slice %1 {offsets = [72, 0], sizes = [32, 1], strides = [1, 1]} : vector<104x32xf32> to vector<32x1xf32>
    %6 = vector.extract_strided_slice %1 {offsets = [72, 1], sizes = [32, 1], strides = [1, 1]} : vector<104x32xf32> to vector<32x1xf32>
    %7 = vector.extract_strided_slice %1 {offsets = [72, 2], sizes = [8, 1], strides = [1, 1]} : vector<104x32xf32> to vector<8x1xf32>
    %cst = arith.constant dense<0.000000e+00> : vector<32x8xf32>
    %8 = tpu.matmul %4, %0, %cst {dimension_numbers = #tpu.dot_dimension_numbers<[1], [0], [0], [1], [0, 0, 1, 1], [], []>} : vector<32x4xf32>, vector<4x8xf32>, vector<32x8xf32> -> vector<32x8xf32>
    %9 = vector.broadcast %5 : vector<32x1xf32> to vector<32x8xf32>
    %10 = arith.addf %8, %9 : vector<32x8xf32>
    %cst_3 = arith.constant 0.00999999977 : f32
    %11 = vector.broadcast %cst_3 : f32 to vector<32x8xf32>
    %12 = arith.mulf %11, %10 : vector<32x8xf32>
    %13 = arith.maximumf %10, %12 : vector<32x8xf32>
    %cst_4 = arith.constant dense<0.000000e+00> : vector<32x8xf32>
    %14 = tpu.matmul %2, %13, %cst_4 {dimension_numbers = #tpu.dot_dimension_numbers<[1], [0], [0], [1], [0, 0, 1, 1], [], []>} : vector<32x32xf32>, vector<32x8xf32>, vector<32x8xf32> -> vector<32x8xf32>
    %15 = vector.broadcast %6 : vector<32x1xf32> to vector<32x8xf32>
    %16 = arith.addf %14, %15 : vector<32x8xf32>
    %cst_5 = arith.constant 0.00999999977 : f32
    %17 = vector.broadcast %cst_5 : f32 to vector<32x8xf32>
    %18 = arith.mulf %17, %16 : vector<32x8xf32>
    %19 = arith.maximumf %16, %18 : vector<32x8xf32>
    %cst_6 = arith.constant dense<0.000000e+00> : vector<8x8xf32>
    %20 = tpu.matmul %3, %19, %cst_6 {dimension_numbers = #tpu.dot_dimension_numbers<[1], [0], [0], [1], [0, 0, 1, 1], [], []>} : vector<8x32xf32>, vector<32x8xf32>, vector<8x8xf32> -> vector<8x8xf32>
    %21 = vector.broadcast %7 : vector<8x1xf32> to vector<8x8xf32>
    %22 = arith.addf %20, %21 : vector<8x8xf32>
    %c0_7 = arith.constant 0 : index
    %c0_8 = arith.constant 0 : index
    %23 = vector.load %arg2[%c0_7, %c0_8] : memref<8x8xf32, #tpu.memory_space<vmem>>, vector<8x8xf32>
    tpu.vector_store %arg2[%c0_7, %c0_8], %22 {strides = array<i32>} : memref<8x8xf32, #tpu.memory_space<vmem>>, vector<8x8xf32>,
    return
  }
}

</mosaic_0001>

<llo_original>
// kernel: tpu_custom_call.1
$region0: #{tpu_custom_call.1}
  #allocation0 [shape = 'u32[]', space=smem, size = 0x4, offset = 0x4, fixed_abs, tag = 'smem constant byte address 0x4 - core index']
  #allocation1 [shape = 'u32[144,128]{1,0:T(1,128)}', space=vmem, size = 0x12000, scoped, tag = 'internal scratch']
  %s0 = inlined_call_operand.vmem [shape: f32[4,8], index: 0, kind: input, shape index: {}]
  %s1 = inlined_call_operand.vmem [shape: f32[104,32], index: 1, kind: input, shape index: {}]
  %s2 = inlined_call_operand.hbm [shape: f32[8,8], index: 2, kind: output, shape index: {}]
  %s3 = sld [smem:[#allocation0]]
  $region18: #{tpu_custom_call.1} parent=0
    _
  %s5 = ssub.s32 1, %s3
  %s6 = scalar_select 0, %s5, %s3
  $region1: #{tpu_custom_call.1} parent=0
    #allocation2 [shape = 'u8[4096]{0}', space=vmem, size = 0x1000, scoped, tag = 'output window, operand 0, single buffered']
    #allocation3 [shape = 's32[1]{0}', space=sflag, size = 0x4, scoped, tag = 'scoped memory for tpu_custom_call.1']
    %7 = vsyncpa [#allocation3], 0
    // Predicated region
    $region2: #{tpu_custom_call.1} parent=1 // pred_check
      _
    $region3: #{tpu_custom_call.1} parent=1 // pred_check_branch
      %9 = sbr.rel (0) target = $region5
    $region4: #{tpu_custom_call.1} parent=1 // pred_region
      _
    $region5: #{tpu_custom_call.1} parent=1 // pred_fallthru
      _
    // Predicated region
    $region6: #{tpu_custom_call.1} parent=1 // pred_check
      _
    $region7: #{tpu_custom_call.1} parent=1 // pred_check_branch
      %11 = sbr.rel (0) target = $region9
    $region8: #{tpu_custom_call.1} parent=1 // pred_region
      _
    $region9: #{tpu_custom_call.1} parent=1 // pred_fallthru
      _
    %v12 = vld [vmem:[%s0] sm:$0xf]
    %v13 = vld [vmem:[%s1] sm:$0xff]
    %v14 = vld [vmem:[%s1 + $0x8] sm:$0xff]
    %v15 = vld [vmem:[%s1 + $0x10] sm:$0xff]
    %v16 = vld [vmem:[%s1 + $0x18] sm:$0xff]
    %v17 = vld [vmem:[%s1 + $0x20] sm:$0xff]
    %v18 = vld [vmem:[%s1 + $0x28] sm:$0xff]
    %v19 = vld [vmem:[%s1 + $0x30] sm:$0xff]
    %v20 = vld [vmem:[%s1 + $0x38] sm:$0xff]
    %v21 = vld [vmem:[%s1 + $0x40] sm:$0xff]
    %v22 = vld [vmem:[%s1 + $0x48] sm:$0xff]
    %v23 = vld [vmem:[%s1 + $0x50] sm:$0xff]
    %v24 = vld [vmem:[%s1 + $0x58] sm:$0xff]
    %v25 = vld [vmem:[%s1 + $0x60] sm:$0xff]
    %27 = vset.pattern.permute.xlu0 0
    %28 = vperm.xlu0 %27, %v22
    %v29 = vpop.permute.xlu0 %28
    %32 = vset.pattern.permute.xlu0 0
    %33 = vperm.xlu0 %32, %v23
    %v34 = vpop.permute.xlu0 %33
    %37 = vset.pattern.permute.xlu0 0
    %38 = vperm.xlu0 %37, %v24
    %v39 = vpop.permute.xlu0 %38
    %42 = vset.pattern.permute.xlu0 0
    %43 = vperm.xlu0 %42, %v25
    %v44 = vpop.permute.xlu0 %43
    %vm46 = vcmask 31744
    %v48 = vsel %vm46, %v18, 0
    %v51 = vsel %vm46, %v19, 0
    %v54 = vsel %vm46, %v20, 0
    %v57 = vsel %vm46, %v21, 0
    %vm59 = vcmask 1043456
    %v61 = vsel %vm59, %v12, 0
    %63 = vmatprep.subr.mxu0 0.0
    %64 = vmatpush1.msra.mxu0 0.0
    %65 = vmatprep.subr.mxu0 0.0
    %66 = vmatpush1.msra.mxu0 0.0
    %67 = vmatprep.subr.mxu0 0.0
    %68 = vmatpush1.msra.mxu0 0.0
    %69 = vmatprep.subr.mxu0 0.0
    %70 = vmatpush1.msra.mxu0 0.0
    %71 = vmatprep.subr.mxu0 0.0
    %72 = vmatpush1.msra.mxu0 0.0
    %73 = vmatprep.subr.mxu0 0.0
    %74 = vmatpush1.msra.mxu0 0.0
    %75 = vmatprep.subr.mxu0 0.0
    %76 = vmatpush1.msra.mxu0 0.0
    %77 = vmatprep.subr.mxu0 0.0
    %78 = vmatpush1.msra.mxu0 0.0
    %79 = vmatprep.subr.mxu0 0.0
    %80 = vmatpush1.msra.mxu0 0.0
    %81 = vmatprep.subr.mxu0 0.0
    %82 = vmatpush1.msra.mxu0 0.0
    %83 = vmatprep.subr.mxu0 0.0
    %84 = vmatpush1.msra.mxu0 0.0
    %85 = vmatprep.subr.mxu0 0.0
    %86 = vmatpush1.msra.mxu0 0.0
    %87 = vmatprep.subr.mxu0 0.0
    %88 = vmatpush1.msra.mxu0 0.0
    %89 = vmatprep.subr.mxu0 0.0
    %90 = vmatpush1.msra.mxu0 0.0
    %91 = vmatprep.subr.mxu0 0.0
    %92 = vmatpush1.msra.mxu0 0.0
    %93 = vmatprep.subr.mxu0 0.0
    %94 = vmatpush1.msra.mxu0 %v61
    %95 = vmatprep.subr.mxu0 0.0
    %96 = vmatpush2.msra.mxu0 0.0
    %97 = vmatprep.subr.mxu0 0.0
    %98 = vmatpush2.msra.mxu0 0.0
    %99 = vmatprep.subr.mxu0 0.0
    %100 = vmatpush2.msra.mxu0 0.0
    %101 = vmatprep.subr.mxu0 0.0
    %102 = vmatpush2.msra.mxu0 0.0
    %103 = vmatprep.subr.mxu0 0.0
    %104 = vmatpush2.msra.mxu0 0.0
    %105 = vmatprep.subr.mxu0 0.0
    %106 = vmatpush2.msra.mxu0 0.0
    %107 = vmatprep.subr.mxu0 0.0
    %108 = vmatpush2.msra.mxu0 0.0
    %109 = vmatprep.subr.mxu0 0.0
    %110 = vmatpush2.msra.mxu0 0.0
    %111 = vmatprep.subr.mxu0 0.0
    %112 = vmatpush2.msra.mxu0 0.0
    %113 = vmatprep.subr.mxu0 0.0
    %114 = vmatpush2.msra.mxu0 0.0
    %115 = vmatprep.subr.mxu0 0.0
    %116 = vmatpush2.msra.mxu0 0.0
    %117 = vmatprep.subr.mxu0 0.0
    %118 = vmatpush2.msra.mxu0 0.0
    %119 = vmatprep.subr.mxu0 0.0
    %120 = vmatpush2.msra.mxu0 0.0
    %121 = vmatprep.subr.mxu0 0.0
    %122 = vmatpush2.msra.mxu0 0.0
    %123 = vmatprep.subr.mxu0 0.0
    %124 = vmatpush2.msra.mxu0 0.0
    %125 = vmatprep.subr.mxu0 0.0
    %126 = vmatpush2.msra.mxu0 0.0
    %127 = vmatprep.mubr.f32.mxu0 0.0
    %128 = vmatmul.mubr.f32.gmra.mxu0 %v48
    %v129 = vpop.f32.mrf.mxu0
    %v130 = vadd.f32 %v29, %v129
    %v131 = vpop.f32.mrf.mxu0
    %132 = vmatprep.mubr.f32.mxu0 0.0
    %133 = vmatmul.mubr.f32.gmra.mxu0 %v51
    %v134 = vpop.f32.mrf.mxu0
    %v135 = vadd.f32 %v34, %v134
    %v136 = vpop.f32.mrf.mxu0
    %137 = vmatprep.mubr.f32.mxu0 0.0
    %138 = vmatmul.mubr.f32.gmra.mxu0 %v54
    %v139 = vpop.f32.mrf.mxu0
    %v140 = vadd.f32 %v39, %v139
    %v141 = vpop.f32.mrf.mxu0
    %142 = vmatprep.mubr.f32.mxu0 0.0
    %143 = vmatmul.mubr.f32.gmra.mxu0 %v57
    %v144 = vpop.f32.mrf.mxu0
    %v145 = vadd.f32 %v44, %v144
    %v146 = vpop.f32.mrf.mxu0
    %147 = vdwg.mxu0
    %v148 = vmul.f32 %v130, 0.01
    %v149 = vmul.f32 %v135, 0.01
    %v150 = vmul.f32 %v140, 0.01
    %v151 = vmul.f32 %v145, 0.01
    %v152 = vmax.f32 %v130, %v148
    %v153 = vmax.f32 %v135, %v149
    %v154 = vmax.f32 %v140, %v150
    %v155 = vmax.f32 %v145, %v151
    %156 = vset.pattern.permute.xlu0 1
    %157 = vperm.xlu0 %156, %v22
    %v158 = vpop.permute.xlu0 %157
    %160 = vset.pattern.permute.xlu0 1
    %161 = vperm.xlu0 %160, %v23
    %v162 = vpop.permute.xlu0 %161
    %164 = vset.pattern.permute.xlu0 1
    %165 = vperm.xlu0 %164, %v24
    %v166 = vpop.permute.xlu0 %165
    %168 = vset.pattern.permute.xlu0 1
    %169 = vperm.xlu0 %168, %v25
    %v170 = vpop.permute.xlu0 %169
    %vm172 = vcmask 261120
    %v174 = vsel %vm172, %v13, 0
    %v177 = vsel %vm172, %v14, 0
    %v180 = vsel %vm172, %v15, 0
    %v183 = vsel %vm172, %v16, 0
    %185 = vmatprep.subr.mxu0 0.0
    %186 = vmatpush1.msra.mxu0 0.0
    %187 = vmatprep.subr.mxu0 0.0
    %188 = vmatpush1.msra.mxu0 0.0
    %189 = vmatprep.subr.mxu0 0.0
    %190 = vmatpush1.msra.mxu0 0.0
    %191 = vmatprep.subr.mxu0 0.0
    %192 = vmatpush1.msra.mxu0 0.0
    %193 = vmatprep.subr.mxu0 0.0
    %194 = vmatpush1.msra.mxu0 0.0
    %195 = vmatprep.subr.mxu0 0.0
    %196 = vmatpush1.msra.mxu0 0.0
    %197 = vmatprep.subr.mxu0 0.0
    %198 = vmatpush1.msra.mxu0 0.0
    %199 = vmatprep.subr.mxu0 0.0
    %200 = vmatpush1.msra.mxu0 0.0
    %201 = vmatprep.subr.mxu0 0.0
    %202 = vmatpush1.msra.mxu0 0.0
    %203 = vmatprep.subr.mxu0 0.0
    %204 = vmatpush1.msra.mxu0 0.0
    %205 = vmatprep.subr.mxu0 0.0
    %206 = vmatpush1.msra.mxu0 0.0
    %207 = vmatprep.subr.mxu0 0.0
    %208 = vmatpush1.msra.mxu0 0.0
    %209 = vmatprep.subr.mxu0 0.0
    %210 = vmatpush1.msra.mxu0 %v155
    %211 = vmatprep.subr.mxu0 0.0
    %212 = vmatpush1.msra.mxu0 %v154
    %213 = vmatprep.subr.mxu0 0.0
    %214 = vmatpush1.msra.mxu0 %v153
    %215 = vmatprep.subr.mxu0 0.0
    %216 = vmatpush1.msra.mxu0 %v152
    %217 = vmatprep.subr.mxu0 0.0
    %218 = vmatpush2.msra.mxu0 0.0
    %219 = vmatprep.subr.mxu0 0.0
    %220 = vmatpush2.msra.mxu0 0.0
    %221 = vmatprep.subr.mxu0 0.0
    %222 = vmatpush2.msra.mxu0 0.0
    %223 = vmatprep.subr.mxu0 0.0
    %224 = vmatpush2.msra.mxu0 0.0
    %225 = vmatprep.subr.mxu0 0.0
    %226 = vmatpush2.msra.mxu0 0.0
    %227 = vmatprep.subr.mxu0 0.0
    %228 = vmatpush2.msra.mxu0 0.0
    %229 = vmatprep.subr.mxu0 0.0
    %230 = vmatpush2.msra.mxu0 0.0
    %231 = vmatprep.subr.mxu0 0.0
    %232 = vmatpush2.msra.mxu0 0.0
    %233 = vmatprep.subr.mxu0 0.0
    %234 = vmatpush2.msra.mxu0 0.0
    %235 = vmatprep.subr.mxu0 0.0
    %236 = vmatpush2.msra.mxu0 0.0
    %237 = vmatprep.subr.mxu0 0.0
    %238 = vmatpush2.msra.mxu0 0.0
    %239 = vmatprep.subr.mxu0 0.0
    %240 = vmatpush2.msra.mxu0 0.0
    %241 = vmatprep.subr.mxu0 0.0
    %242 = vmatpush2.msra.mxu0 0.0
    %243 = vmatprep.subr.mxu0 0.0
    %244 = vmatpush2.msra.mxu0 0.0
    %245 = vmatprep.subr.mxu0 0.0
    %246 = vmatpush2.msra.mxu0 0.0
    %247 = vmatprep.subr.mxu0 0.0
    %248 = vmatpush2.msra.mxu0 0.0
    %249 = vmatprep.mubr.f32.mxu0 0.0
    %250 = vmatmul.mubr.f32.gmra.mxu0 %v174
    %v251 = vpop.f32.mrf.mxu0
    %v252 = vadd.f32 %v158, %v251
    %v253 = vpop.f32.mrf.mxu0
    %254 = vmatprep.mubr.f32.mxu0 0.0
    %255 = vmatmul.mubr.f32.gmra.mxu0 %v177
    %v256 = vpop.f32.mrf.mxu0
    %v257 = vadd.f32 %v162, %v256
    %v258 = vpop.f32.mrf.mxu0
    %259 = vmatprep.mubr.f32.mxu0 0.0
    %260 = vmatmul.mubr.f32.gmra.mxu0 %v180
    %v261 = vpop.f32.mrf.mxu0
    %v262 = vadd.f32 %v166, %v261
    %v263 = vpop.f32.mrf.mxu0
    %264 = vmatprep.mubr.f32.mxu0 0.0
    %265 = vmatmul.mubr.f32.gmra.mxu0 %v183
    %v266 = vpop.f32.mrf.mxu0
    %v267 = vadd.f32 %v170, %v266
    %v268 = vpop.f32.mrf.mxu0
    %269 = vdwg.mxu0
    %v270 = vmul.f32 %v252, 0.01
    %v271 = vmul.f32 %v257, 0.01
    %v272 = vmul.f32 %v262, 0.01
    %v273 = vmul.f32 %v267, 0.01
    %v274 = vmax.f32 %v252, %v270
    %v275 = vmax.f32 %v257, %v271
    %v276 = vmax.f32 %v262, %v272
    %v277 = vmax.f32 %v267, %v273
    %278 = vset.pattern.permute.xlu0 2
    %279 = vperm.xlu0 %278, %v22
    %v280 = vpop.permute.xlu0 %279
    %v283 = vsel %vm172, %v17, 0
    %285 = vmatprep.subr.mxu0 0.0
    %286 = vmatpush1.msra.mxu0 0.0
    %287 = vmatprep.subr.mxu0 0.0
    %288 = vmatpush1.msra.mxu0 0.0
    %289 = vmatprep.subr.mxu0 0.0
    %290 = vmatpush1.msra.mxu0 0.0
    %291 = vmatprep.subr.mxu0 0.0
    %292 = vmatpush1.msra.mxu0 0.0
    %293 = vmatprep.subr.mxu0 0.0
    %294 = vmatpush1.msra.mxu0 0.0
    %295 = vmatprep.subr.mxu0 0.0
    %296 = vmatpush1.msra.mxu0 0.0
    %297 = vmatprep.subr.mxu0 0.0
    %298 = vmatpush1.msra.mxu0 0.0
    %299 = vmatprep.subr.mxu0 0.0
    %300 = vmatpush1.msra.mxu0 0.0
    %301 = vmatprep.subr.mxu0 0.0
    %302 = vmatpush1.msra.mxu0 0.0
    %303 = vmatprep.subr.mxu0 0.0
    %304 = vmatpush1.msra.mxu0 0.0
    %305 = vmatprep.subr.mxu0 0.0
    %306 = vmatpush1.msra.mxu0 0.0
    %307 = vmatprep.subr.mxu0 0.0
    %308 = vmatpush1.msra.mxu0 0.0
    %309 = vmatprep.subr.mxu0 0.0
    %310 = vmatpush1.msra.mxu0 %v277
    %311 = vmatprep.subr.mxu0 0.0
    %312 = vmatpush1.msra.mxu0 %v276
    %313 = vmatprep.subr.mxu0 0.0
    %314 = vmatpush1.msra.mxu0 %v275
    %315 = vmatprep.subr.mxu0 0.0
    %316 = vmatpush1.msra.mxu0 %v274
    %317 = vmatprep.subr.mxu0 0.0
    %318 = vmatpush2.msra.mxu0 0.0
    %319 = vmatprep.subr.mxu0 0.0
    %320 = vmatpush2.msra.mxu0 0.0
    %321 = vmatprep.subr.mxu0 0.0
    %322 = vmatpush2.msra.mxu0 0.0
    %323 = vmatprep.subr.mxu0 0.0
    %324 = vmatpush2.msra.mxu0 0.0
    %325 = vmatprep.subr.mxu0 0.0
    %326 = vmatpush2.msra.mxu0 0.0
    %327 = vmatprep.subr.mxu0 0.0
    %328 = vmatpush2.msra.mxu0 0.0
    %329 = vmatprep.subr.mxu0 0.0
    %330 = vmatpush2.msra.mxu0 0.0
    %331 = vmatprep.subr.mxu0 0.0
    %332 = vmatpush2.msra.mxu0 0.0
    %333 = vmatprep.subr.mxu0 0.0
    %334 = vmatpush2.msra.mxu0 0.0
    %335 = vmatprep.subr.mxu0 0.0
    %336 = vmatpush2.msra.mxu0 0.0
    %337 = vmatprep.subr.mxu0 0.0
    %338 = vmatpush2.msra.mxu0 0.0
    %339 = vmatprep.subr.mxu0 0.0
    %340 = vmatpush2.msra.mxu0 0.0
    %341 = vmatprep.subr.mxu0 0.0
    %342 = vmatpush2.msra.mxu0 0.0
    %343 = vmatprep.subr.mxu0 0.0
    %344 = vmatpush2.msra.mxu0 0.0
    %345 = vmatprep.subr.mxu0 0.0
    %346 = vmatpush2.msra.mxu0 0.0
    %347 = vmatprep.subr.mxu0 0.0
    %348 = vmatpush2.msra.mxu0 0.0
    %349 = vmatprep.mubr.f32.mxu0 0.0
    %350 = vmatmul.mubr.f32.gmra.mxu0 %v283
    %v351 = vpop.f32.mrf.mxu0
    %v352 = vadd.f32 %v280, %v351
    %v353 = vpop.f32.mrf.mxu0
    %354 = vdwg.mxu0
    %vm355 = vcmask 64512
    %356 = vst.msk [vmem:[#allocation2] sm:$0xff] %vm355, %v352
    // Predicated region
    $region10: #{tpu_custom_call.1} parent=1 // pred_check
      _
    $region11: #{tpu_custom_call.1} parent=1 // pred_check_branch
      %358 = sbr.rel (0) target = $region13
    $region12: #{tpu_custom_call.1} parent=1 // pred_region
      %s360 = ssub.s32 128, 128
      %361 = vsyncadd [#allocation3], %s360
      %s363 = sshll.u32 [#allocation2], 4
      %s364 = int_to_ptr.vmem [resolvable:$true] %s363
      %366 = dma.vmem_to_hbm [thread:$0]  %s364, 128, %s2, [#allocation3]
    $region13: #{tpu_custom_call.1} parent=1 // pred_fallthru
      _
    // Predicated region
    $region14: #{tpu_custom_call.1} parent=1 // pred_check
      _
    $region15: #{tpu_custom_call.1} parent=1 // pred_check_branch
      %368 = sbr.rel (0) target = $region17
    $region16: #{tpu_custom_call.1} parent=1 // pred_region
      %369 = dma.done [#allocation3], 128
    $region17: #{tpu_custom_call.1} parent=1 // pred_fallthru
      _
    %370 = vsyncpa [#allocation3], 1

</llo_original>
